<compile_context>
chip_gen: v6e
topology: v6e:2x2x1
jax: 0.10.0
libtpu: 0.0.40
codegen_flags: <defaults>
</compile_context>

<pallas_src>
import jax
import jax.numpy as jnp
import numpy as np
from jax.experimental import pallas as pl
from jax.experimental.pallas import tpu as pltpu


def _round_up(x, m):
    return ((x + m - 1) // m) * m


def _vmem_capacity_bytes():
    try:
        return int(pltpu.get_tpu_info().vmem_capacity_bytes)
    except Exception:
        return 64 * 1024 * 1024          # conservative fallback (v7x-sized VMEM)


def _budgets():
    """(tile budget, scoped VMEM limit) in bytes, per TPU generation."""
    vmem = _vmem_capacity_bytes()
    if vmem >= 100 * 1024 * 1024:        # v5e / v6e: 128 MiB VMEM
        return 28 * 1024 * 1024, 48 * 1024 * 1024
    return 18 * 1024 * 1024, 40 * 1024 * 1024   # v7x: 64 MiB physical VMEM


def _choose_tiles(n_rows, d, act_bytes, resid_in_bytes, resid_out_bytes,
                  mxu_bytes, has_residual, write_resid, budget):
    """Pick (tm, tn): row tile and mixer-weight column tile."""
    # Column-tile the resident weight so it never eats more than ~1/3 of the budget
    # (prevents the tm->8 cliff at large D, mandatory on v7x's 64 MiB VMEM).
    tn = d
    while tn > 512 and d * tn * mxu_bytes > budget // 3:
        tn = _round_up(tn // 2, 128)
    multi_col = tn < d
    weight_bufs = 2 if multi_col else 1          # Buffered(1) when grid-invariant
    weight_vmem = weight_bufs * d * tn * mxu_bytes

    per_row = 2 * d * act_bytes                  # hidden input (double-buffered)
    if has_residual:
        per_row += 2 * d * resid_in_bytes        # residual input
    per_row += 2 * tn * act_bytes                # mixed output
    if write_resid:
        per_row += 2 * d * resid_out_bytes       # residual output
    if multi_col:
        per_row += d * mxu_bytes                 # normed-y VMEM scratch
    per_row += 3 * d * 4 + tn * 4                # fp32 LN temporaries + fp32 acc

    tm = 2048
    while tm > 8 and weight_vmem + tm * per_row > budget:
        tm //= 2
    # Make sure the row axis has >= 2 tiles so both v7x TensorCores get work
    # (harmless on 1-TC v5e/v6e).
    tm = min(tm, max(8, _round_up((n_rows + 1) // 2, 8)))
    if tm >= n_rows:
        tm = n_rows            # single full-extent row block (always a legal block)
    return tm, tn


def _make_block_kernel(*, has_residual, write_resid, multi_col, eps,
                       mxu_dtype, precision):
    """Fused add + LayerNorm(fp32 stats) + (tm,D)@(D,tn)+bias for one grid step."""

    def kernel(*refs):
        idx = 0
        h_ref = refs[idx]; idx += 1
        r_ref = None
        if has_residual:
            r_ref = refs[idx]; idx += 1
        lnw_ref, lnb_ref, mw_ref, mb_ref = refs[idx:idx + 4]
        idx += 4
        mixed_ref = refs[idx]; idx += 1
        resid_ref = None
        if write_resid:
            resid_ref = refs[idx]; idx += 1
        y_scratch = refs[idx] if multi_col else None

        def _normed():
            res = h_ref[...].astype(jnp.float32)
            if has_residual:
                res = res + r_ref[...].astype(jnp.float32)
            if write_resid:
                resid_ref[...] = res.astype(resid_ref.dtype)
            mean = jnp.mean(res, axis=-1, keepdims=True)
            centered = res - mean
            var = jnp.mean(centered * centered, axis=-1, keepdims=True)
            y = centered * jax.lax.rsqrt(var + eps) * lnw_ref[...] + lnb_ref[...]
            return y.astype(mxu_dtype)

        if multi_col:
            # Compute LN (and the residual write) once per row tile, reuse the cached
            # normed activations for every weight-column tile.
            @pl.when(pl.program_id(1) == 0)
            def _():
                y_scratch[...] = _normed()
            y = y_scratch[...]
        else:
            y = _normed()

        acc = jnp.dot(y, mw_ref[...], preferred_element_type=jnp.float32,
                      precision=precision)
        mixed_ref[...] = (acc + mb_ref[...]).astype(mixed_ref.dtype)

    return kernel


def block_forward(hidden_states, residual, ln_weight, ln_bias,
                  mixer_weight, mixer_bias, *, eps=1e-5,
                  residual_in_fp32=True, donate_residual=False):
    """Returns (hidden_states_out, residual_out), matching Block.forward semantics."""
    B, L, D = hidden_states.shape
    N = B * L
    out_dtype = hidden_states.dtype
    resid_dtype = jnp.float32 if residual_in_fp32 else out_dtype

    low_prec = out_dtype in (jnp.dtype(jnp.bfloat16), jnp.dtype(jnp.float16))
    mxu_dtype = jnp.bfloat16 if low_prec else jnp.float32
    # fp32 activations: multi-pass bf16 MXU (HIGHEST) instead of a slow plain-f32 matmul.
    precision = None if low_prec else jax.lax.Precision.HIGHEST

    has_residual = residual is not None
    # First block with matching residual dtype: residual == hidden_states bit-for-bit,
    # so skip that output stream entirely (~1/3 of the call's HBM traffic).
    write_resid = has_residual or (resid_dtype != out_dtype)

    tile_budget, vmem_limit = _budgets()
    act_bytes = jnp.dtype(out_dtype).itemsize
    mxu_bytes = jnp.dtype(mxu_dtype).itemsize
    resid_in_bytes = jnp.dtype(residual.dtype).itemsize if has_residual else 0
    resid_out_bytes = jnp.dtype(resid_dtype).itemsize if write_resid else 0

    tm, tn = _choose_tiles(N, D, act_bytes, resid_in_bytes, resid_out_bytes,
                           mxu_bytes, has_residual, write_resid, tile_budget)
    n_row = pl.cdiv(N, tm)
    n_col = pl.cdiv(D, tn)
    multi_col = n_col > 1

    # Grid-invariant params pre-cast in the wrapper: halves the weight DMA in the bf16
    # path and removes per-grid-step VPU casts of the LN params / bias.
    h2 = hidden_states.reshape(N, D)
    lnw = ln_weight.reshape(1, D).astype(jnp.float32)
    lnb = ln_bias.reshape(1, D).astype(jnp.float32)
    mw = mixer_weight.astype(mxu_dtype)
    mb2 = mixer_bias.reshape(1, D).astype(jnp.float32)

    row_spec = pl.BlockSpec((tm, D), lambda i, j: (i, 0))
    const_row = pl.BlockSpec((1, D), lambda i, j: (0, 0))
    if multi_col:
        w_spec = pl.BlockSpec((D, tn), lambda i, j: (0, j))
    else:
        # Grid-invariant weight: single-buffer it to free VMEM for a larger row tile.
        w_spec = pl.BlockSpec((D, D), lambda i, j: (0, 0),
                              pipeline_mode=pl.Buffered(1))
    mb_spec = pl.BlockSpec((1, tn), lambda i, j: (0, j))
    mixed_spec = pl.BlockSpec((tm, tn), lambda i, j: (i, j))

    in_arrays = [h2]
    in_specs = [row_spec]
    if has_residual:
        in_arrays.append(residual.reshape(N, D))
        in_specs.append(row_spec)
    in_arrays += [lnw, lnb, mw, mb2]
    in_specs += [const_row, const_row, w_spec, mb_spec]

    out_shapes = [jax.ShapeDtypeStruct((N, D), out_dtype)]
    out_specs = [mixed_spec]
    if write_resid:
        out_shapes.append(jax.ShapeDtypeStruct((N, D), resid_dtype))
        out_specs.append(pl.BlockSpec((tm, D), lambda i, j: (i, 0)))

    scratch_shapes = [pltpu.VMEM((tm, D), mxu_dtype)] if multi_col else []

    io_aliases = {}
    if (donate_residual and has_residual and write_resid
            and residual.dtype == jnp.dtype(resid_dtype)):
        io_aliases = {1: 1}   # reuse the (donated) residual buffer for residual_out

    kernel = _make_block_kernel(has_residual=has_residual, write_resid=write_resid,
                                multi_col=multi_col, eps=eps,
                                mxu_dtype=mxu_dtype, precision=precision)

    outs = pl.pallas_call(
        kernel,
        out_shape=tuple(out_shapes),
        grid=(n_row, n_col),
        in_specs=in_specs,
        out_specs=tuple(out_specs),
        scratch_shapes=scratch_shapes,
        input_output_aliases=io_aliases,
        compiler_params=pltpu.CompilerParams(
            dimension_semantics=("parallel", "arbitrary"),
            vmem_limit_bytes=vmem_limit),
    )(*in_arrays)

    mixed = outs[0].reshape(B, L, D)
    if write_resid:
        new_resid = outs[1].reshape(B, L, D)
    else:
        new_resid = hidden_states    # first block, same dtype: residual == hidden_states
    return mixed, new_resid


# ----------------------------- tests ---------------------------------------


def _reference(hidden, residual, ln_w, ln_b, mw, mb, *, eps, mxu_dtype, precision):
    res = hidden.astype(jnp.float32) if residual is None else \
        residual.astype(jnp.float32) + hidden.astype(jnp.float32)
    mean = res.mean(-1, keepdims=True)
    var = ((res - mean) ** 2).mean(-1, keepdims=True)
    normed = (res - mean) / jnp.sqrt(var + eps) * ln_w + ln_b
    mixed = jnp.dot(normed.astype(mxu_dtype), mw.astype(mxu_dtype),
                    preferred_element_type=jnp.float32, precision=precision) + mb
    return mixed.astype(hidden.dtype), res


def _check(B, L, D, with_residual, key, dtype=jnp.float32):
    k1, k2, k3, k4 = jax.random.split(key, 4)
    hidden = jax.random.normal(k1, (B, L, D), dtype=jnp.float32).astype(dtype)
    residual = (jax.random.normal(k2, (B, L, D), dtype=jnp.float32).astype(dtype)
                if with_residual else None)
    ln_weight = jnp.linspace(0.8, 1.2, D, dtype=jnp.float32)
    ln_bias = jnp.linspace(-0.1, 0.1, D, dtype=jnp.float32)
    mixer_weight = jax.random.normal(k3, (D, D), dtype=jnp.float32) / np.sqrt(D)
    mixer_bias = 0.01 * jax.random.normal(k4, (D,), dtype=jnp.float32)

    out_h, out_r = block_forward(hidden, residual, ln_weight, ln_bias,
                                 mixer_weight, mixer_bias,
                                 eps=1e-5, residual_in_fp32=True)
    jax.block_until_ready((out_h, out_r))

    low_prec = dtype in (jnp.bfloat16, jnp.float16)
    ref_h, ref_r = _reference(
        hidden, residual, ln_weight, ln_bias, mixer_weight, mixer_bias, eps=1e-5,
        mxu_dtype=jnp.bfloat16 if low_prec else jnp.float32,
        precision=None if low_prec else jax.lax.Precision.HIGHEST)

    tol = 2e-2 if low_prec else 1e-5
    np.testing.assert_allclose(np.asarray(out_h.astype(jnp.float32)),
                               np.asarray(ref_h.astype(jnp.float32)),
                               rtol=tol, atol=tol)
    np.testing.assert_allclose(np.asarray(out_r.astype(jnp.float32)),
                               np.asarray(ref_r),
                               rtol=1e-6, atol=1e-6)
    assert out_h.shape == (B, L, D) and out_r.shape == (B, L, D)
    assert out_h.dtype == hidden.dtype          # activation dtype preserved
    assert out_r.dtype == jnp.float32           # residual_in_fp32


if __name__ == "__main__":
    key = jax.random.PRNGKey(0)
    k_a, k_b, k_c, k_d, k_e = jax.random.split(key, 5)
    _check(2, 8, 128, with_residual=True, key=k_a)                      # standard block
    _check(2, 8, 128, with_residual=False, key=k_b)                     # first block (residual=None)
    _check(1, 5, 128, with_residual=True, key=k_c)                      # tiny N -> full-extent row block
    _check(4, 5, 128, with_residual=True, key=k_d)                      # ragged N -> masked tail block
    _check(2, 8, 128, with_residual=True, key=k_e, dtype=jnp.bfloat16)  # bf16 MXU fast path
    print("KERNEL_OK")
</pallas_src>

<mosaic_0001>
module attributes {stable_mosaic.version = 11 : i64} {
  func.func @kernel(%arg0: i32, %arg1: i32, %arg2: memref<8x128xf32, #tpu.memory_space<vmem>>, %arg3: memref<8x128xf32, #tpu.memory_space<vmem>>, %arg4: memref<1x128xf32, #tpu.memory_space<vmem>>, %arg5: memref<1x128xf32, #tpu.memory_space<vmem>>, %arg6: memref<128x128xf32, #tpu.memory_space<vmem>>, %arg7: memref<1x128xf32, #tpu.memory_space<vmem>>, %arg8: memref<8x128xf32, #tpu.memory_space<vmem>>, %arg9: memref<8x128xf32, #tpu.memory_space<vmem>>) attributes {dimension_semantics = [#tpu.dimension_semantics<parallel>, #tpu.dimension_semantics<arbitrary>], iteration_bounds = array<i64: 2, 1>, scalar_prefetch = 0 : i64, scratch_operands = 0 : i64, tpu.core_type = #tpu.core_type<tc>, window_params = [{transform_indices = @transform_0, window_bounds = array<i64: 8, 128>}, {transform_indices = @transform_1, window_bounds = array<i64: 8, 128>}, {pipeline_mode = #tpu.pipeline_mode<synchronous>, transform_indices = @transform_2, window_bounds = array<i64: 1, 128>}, {pipeline_mode = #tpu.pipeline_mode<synchronous>, transform_indices = @transform_3, window_bounds = array<i64: 1, 128>}, {pipeline_mode = #tpu.pipeline_mode<synchronous>, transform_indices = @transform_4, window_bounds = array<i64: 128, 128>}, {transform_indices = @transform_5, window_bounds = array<i64: 1, 128>}, {transform_indices = @transform_6, window_bounds = array<i64: 8, 128>}, {transform_indices = @transform_7, window_bounds = array<i64: 8, 128>}]} {
    %c0 = arith.constant 0 : index
    %c0_0 = arith.constant 0 : index
    %0 = vector.load %arg2[%c0, %c0_0] : memref<8x128xf32, #tpu.memory_space<vmem>>, vector<8x128xf32>
    %c0_1 = arith.constant 0 : index
    %c0_2 = arith.constant 0 : index
    %1 = vector.load %arg3[%c0_1, %c0_2] : memref<8x128xf32, #tpu.memory_space<vmem>>, vector<8x128xf32>
    %2 = arith.addf %0, %1 : vector<8x128xf32>
    %c0_3 = arith.constant 0 : index
    %c0_4 = arith.constant 0 : index
    %3 = vector.load %arg9[%c0_3, %c0_4] : memref<8x128xf32, #tpu.memory_space<vmem>>, vector<8x128xf32>
    tpu.vector_store %arg9[%c0_3, %c0_4], %2 {strides = array<i32>} : memref<8x128xf32, #tpu.memory_space<vmem>>, vector<8x128xf32>,
    %cst = arith.constant dense<0.000000e+00> : vector<8xf32>
    %4 = vector.multi_reduction <add>, %2, %cst [1] : vector<8x128xf32> to vector<8xf32>
    %5 = vector.shape_cast %4 : vector<8xf32> to vector<8x1xf32>
    %cst_5 = arith.constant 1.280000e+02 : f32
    %6 = vector.broadcast %cst_5 : f32 to vector<8x1xf32>
    %7 = arith.divf %5, %6 : vector<8x1xf32>
    %8 = vector.broadcast %7 : vector<8x1xf32> to vector<8x128xf32>
    %9 = arith.subf %2, %8 : vector<8x128xf32>
    %10 = arith.mulf %9, %9 : vector<8x128xf32>
    %cst_6 = arith.constant dense<0.000000e+00> : vector<8xf32>
    %11 = vector.multi_reduction <add>, %10, %cst_6 [1] : vector<8x128xf32> to vector<8xf32>
    %12 = vector.shape_cast %11 : vector<8xf32> to vector<8x1xf32>
    %cst_7 = arith.constant 1.280000e+02 : f32
    %13 = vector.broadcast %cst_7 : f32 to vector<8x1xf32>
    %14 = arith.divf %12, %13 : vector<8x1xf32>
    %cst_8 = arith.constant 9.99999974E-6 : f32
    %15 = vector.broadcast %cst_8 : f32 to vector<8x1xf32>
    %16 = arith.addf %14, %15 : vector<8x1xf32>
    %17 = math.rsqrt %16 : vector<8x1xf32>
    %18 = vector.broadcast %17 : vector<8x1xf32> to vector<8x128xf32>
    %19 = arith.mulf %9, %18 : vector<8x128xf32>
    %c0_9 = arith.constant 0 : index
    %c0_10 = arith.constant 0 : index
    %20 = vector.load %arg4[%c0_9, %c0_10] : memref<1x128xf32, #tpu.memory_space<vmem>>, vector<1x128xf32>
    %21 = vector.broadcast %20 : vector<1x128xf32> to vector<8x128xf32>
    %22 = arith.mulf %19, %21 : vector<8x128xf32>
    %c0_11 = arith.constant 0 : index
    %c0_12 = arith.constant 0 : index
    %23 = vector.load %arg5[%c0_11, %c0_12] : memref<1x128xf32, #tpu.memory_space<vmem>>, vector<1x128xf32>
    %24 = vector.broadcast %23 : vector<1x128xf32> to vector<8x128xf32>
    %25 = arith.addf %22, %24 : vector<8x128xf32>
    %c0_13 = arith.constant 0 : index
    %c0_14 = arith.constant 0 : index
    %26 = vector.load %arg6[%c0_13, %c0_14] : memref<128x128xf32, #tpu.memory_space<vmem>>, vector<128x128xf32>
    %cst_15 = arith.constant dense<0.000000e+00> : vector<8x128xf32>
    %27 = tpu.matmul %25, %26, %cst_15 {dimension_numbers = #tpu.dot_dimension_numbers<[1], [0], [0], [1], [0, 0, 1, 1], [], []>, precision = #tpu.contract_precision<fp32>} : vector<8x128xf32>, vector<128x128xf32>, vector<8x128xf32> -> vector<8x128xf32>
    %c0_16 = arith.constant 0 : index
    %c0_17 = arith.constant 0 : index
    %28 = vector.load %arg7[%c0_16, %c0_17] : memref<1x128xf32, #tpu.memory_space<vmem>>, vector<1x128xf32>
    %29 = vector.broadcast %28 : vector<1x128xf32> to vector<8x128xf32>
    %30 = arith.addf %27, %29 : vector<8x128xf32>
    %c0_18 = arith.constant 0 : index
    %c0_19 = arith.constant 0 : index
    %31 = vector.load %arg8[%c0_18, %c0_19] : memref<8x128xf32, #tpu.memory_space<vmem>>, vector<8x128xf32>
    tpu.vector_store %arg8[%c0_18, %c0_19], %30 {strides = array<i32>} : memref<8x128xf32, #tpu.memory_space<vmem>>, vector<8x128xf32>,
    return
  }
  func.func @transform_0(%arg0: i32, %arg1: i32) -> (i32, i32) {
    %c0_i32 = arith.constant 0 : i32
    %c0_i32_0 = arith.constant 0 : i32
    return %arg0, %c0_i32 : i32, i32
  }
  func.func @transform_1(%arg0: i32, %arg1: i32) -> (i32, i32) {
    %c0_i32 = arith.constant 0 : i32
    %c0_i32_0 = arith.constant 0 : i32
    return %arg0, %c0_i32 : i32, i32
  }
  func.func @transform_2(%arg0: i32, %arg1: i32) -> (i32, i32) {
    %c0_i32 = arith.constant 0 : i32
    %c0_i32_0 = arith.constant 0 : i32
    %c0_i32_1 = arith.constant 0 : i32
    return %c0_i32, %c0_i32_0 : i32, i32
  }
  func.func @transform_3(%arg0: i32, %arg1: i32) -> (i32, i32) {
    %c0_i32 = arith.constant 0 : i32
    %c0_i32_0 = arith.constant 0 : i32
    %c0_i32_1 = arith.constant 0 : i32
    return %c0_i32, %c0_i32_0 : i32, i32
  }
  func.func @transform_4(%arg0: i32, %arg1: i32) -> (i32, i32) {
    %c0_i32 = arith.constant 0 : i32
    %c0_i32_0 = arith.constant 0 : i32
    %c0_i32_1 = arith.constant 0 : i32
    return %c0_i32, %c0_i32_0 : i32, i32
  }
  func.func @transform_5(%arg0: i32, %arg1: i32) -> (i32, i32) {
    %c0_i32 = arith.constant 0 : i32
    %c0_i32_0 = arith.constant 0 : i32
    return %c0_i32, %arg1 : i32, i32
  }
  func.func @transform_6(%arg0: i32, %arg1: i32) -> (i32, i32) {
    %c0_i32 = arith.constant 0 : i32
    return %arg0, %arg1 : i32, i32
  }
  func.func @transform_7(%arg0: i32, %arg1: i32) -> (i32, i32) {
    %c0_i32 = arith.constant 0 : i32
    %c0_i32_0 = arith.constant 0 : i32
    return %arg0, %c0_i32 : i32, i32
  }
}

</mosaic_0001>

<llo_original>
// kernel: tpu_custom_call.1
$region0: #{tpu_custom_call.1}
  #allocation0 [shape = 'u32[]', space=smem, size = 0x4, offset = 0x4, fixed_abs, tag = 'smem constant byte address 0x4 - core index']
  #allocation1 [shape = 'u32[144,128]{1,0:T(1,128)}', space=vmem, size = 0x12000, scoped, tag = 'internal scratch']
  %s0 = inlined_call_operand.hbm [shape: f32[16,128], index: 0, kind: input, shape index: {}]
  %s1 = inlined_call_operand.hbm [shape: f32[16,128], index: 1, kind: input, shape index: {}]
  %s2 = inlined_call_operand.vmem [shape: f32[1,128], index: 2, kind: input, shape index: {}]
  %s3 = inlined_call_operand.vmem [shape: f32[1,128], index: 3, kind: input, shape index: {}]
  %s4 = inlined_call_operand.hbm [shape: f32[128,128], index: 4, kind: input, shape index: {}]
  %s5 = inlined_call_operand.vmem [shape: f32[1,128], index: 5, kind: input, shape index: {}]
  %s6 = inlined_call_operand.hbm [shape: f32[16,128], index: 6, kind: output, shape index: {0}]
  %s7 = inlined_call_operand.hbm [shape: f32[16,128], index: 7, kind: output, shape index: {1}]
  %8 = xla_tuple %s6, %s7
  %s9 = sld [smem:[#allocation0]]
  $region77: #{tpu_custom_call.1} parent=0
    _
  %s11 = ssub.s32 1, %s9
  %s12 = scalar_select 0, %s11, %s9
  $region1: #{tpu_custom_call.1} parent=0
    #allocation2 [shape = 'u8[8192]{0}', space=vmem, size = 0x2000, scoped, tag = 'input window, operand 0']
    #allocation3 [shape = 's32[2]{0}', space=sflag, size = 0x8, scoped, tag = 'scoped memory for tpu_custom_call.1']
    #allocation4 [shape = 's32[2]{0}', space=sflag, size = 0x8, scoped, tag = 'scoped memory for tpu_custom_call.1']
    #allocation5 [shape = 'u8[8192]{0}', space=vmem, size = 0x2000, scoped, tag = 'input window, operand 1']
    #allocation6 [shape = 's32[2]{0}', space=sflag, size = 0x8, scoped, tag = 'scoped memory for tpu_custom_call.1']
    #allocation7 [shape = 'u8[65536]{0}', space=vmem, size = 0x10000, scoped, tag = 'input window, operand 4, single buffered']
    #allocation8 [shape = 'u8[8192]{0}', space=vmem, size = 0x2000, scoped, tag = 'output window, operand 0']
    #allocation9 [shape = 'u8[8192]{0}', space=vmem, size = 0x2000, scoped, tag = 'output window, operand 1']
    #allocation10 [shape = 's32[2]{0}', space=sflag, size = 0x8, scoped, tag = 'scoped memory for tpu_custom_call.1']
    %13 = vsyncpa [#allocation3], 0
    %s14 = scalar_lea.sflag [#allocation3], 1
    %15 = vsyncpa %s14, 0
    %16 = vsyncpa [#allocation6], 0
    %s17 = scalar_lea.sflag [#allocation6], 1
    %18 = vsyncpa %s17, 0
    %19 = vsyncpa [#allocation4], 0
    %s20 = scalar_lea.sflag [#allocation4], 1
    %21 = vsyncpa %s20, 0
    %22 = vsyncpa [#allocation10], 0
    %s23 = scalar_lea.sflag [#allocation10], 1
    %24 = vsyncpa %s23, 0
    loop: start=0, step=1, limit=4
    $region2: #{tpu_custom_call.1} parent=1 // loop_pre_header
      _
    $region3: #{tpu_custom_call.1} parent=1 // loop_header
      %s26 = sphi 0, %s30
      %p27 = scmp.ge.s32.totalorder %s26, 4
      %s33 = sphi 0, %s45
      %s34 = sphi 0, %s41
      %s35 = sphi 0, %s33
      %s36 = sphi 0, %s34
      %s37 = sphi 0, %s35
      %s38 = sphi 0, %s36
      %s48 = sphi 0, %s50
      %s51 = sphi 0, %s48
      %s52 = sphi 0, %s51
      %s68 = sphi 0, %s52
      %s74 = sphi 0, %s76
      %s77 = sphi 0, %s74
      %s78 = sphi 0, %s77
      %s94 = sphi 0, %s78
      %s98 = sphi 0, %s98
      %s100 = sphi 0, %s98
      %s101 = sphi 0, %s100
      %s115 = sphi 0, %s101
      %s119 = sphi 0, %s119
      %s121 = sphi 0, %s119
      %s122 = sphi 0, %s121
      %s136 = sphi 0, %s122
      %s140 = sphi 0, %s140
      %s142 = sphi 0, %s140
      %s143 = sphi 0, %s142
      %s157 = sphi 0, %s143
      %s163 = sphi 0, %s165
      %s166 = sphi 0, %s163
      %s167 = sphi 0, %s166
      %s183 = sphi 0, %s167
      %s191 = sphi 0, %s193
      %s194 = sphi 0, %s191
      %s195 = sphi 0, %s194
      %s211 = sphi 0, %s195
      %s217 = sphi 0, %s219
      %s220 = sphi 0, %s217
      %s221 = sphi 0, %s220
      %s237 = sphi 0, %s221
    $region4: #{tpu_custom_call.1} parent=1 // loop_header_branch
      %29 = sbr.rel (%p27) target = $region8
    $region5: #{tpu_custom_call.1} parent=1 // loop_body
      %s31 = ssub.s32 %s26, 1
      %s32 = ssub.s32 %s26, 2
      %s39 = sadd.s32 1, %s34
      %p40 = scmp.ge.s32.totalorder %s39, 1
      %s41 = scalar_select %p40, 0, %s39
      %s42 = sadd.s32 1, %s33
      %s43 = scalar_select %p40, %s42, %s33
      %p44 = scmp.ge.s32.totalorder %s43, 2
      %s45 = scalar_select %p44, 0, %s43
      %s46 = ssub.s32 %s33, %s45
      %p47 = scmp.eq.s32.totalorder %s46, 0
      %s49 = sadd.s32 %s48, 1
      %s50 = scalar_select %p47, %s48, %s49
      %p53 = pneg %p47
      %p54 = scmp.eq.s32.totalorder %s26, 1
      %p55 = por %p53, %p54
      %p56 = scmp.ne.s32.totalorder %s48, %s51
      %p57 = scmp.eq.s32.totalorder %s26, 0
      %p58 = por %p56, %p57
      %p59 = scmp.ne.s32.totalorder %s48, %s51
      %p60 = scmp.eq.s32.totalorder %s31, 1
      %p61 = por %p59, %p60
      %p62 = scmp.ne.s32.totalorder %s51, %s52
      %p63 = scmp.eq.s32.totalorder %s31, 0
      %p64 = por %p62, %p63
      %p65 = scmp.ne.s32.totalorder %s51, %s52
      %p66 = scmp.eq.s32.totalorder %s32, 1
      %p67 = por %p65, %p66
      %p69 = scmp.ne.s32.totalorder %s52, %s68
      %p70 = scmp.eq.s32.totalorder %s32, 0
      %p71 = por %p69, %p70
      %s72 = ssub.s32 %s33, %s45
      %p73 = scmp.eq.s32.totalorder %s72, 0
      %s75 = sadd.s32 %s74, 1
      %s76 = scalar_select %p73, %s74, %s75
      %p79 = pneg %p73
      %p80 = scmp.eq.s32.totalorder %s26, 1
      %p81 = por %p79, %p80
      %p82 = scmp.ne.s32.totalorder %s74, %s77
      %p83 = scmp.eq.s32.totalorder %s26, 0
      %p84 = por %p82, %p83
      %p85 = scmp.ne.s32.totalorder %s74, %s77
      %p86 = scmp.eq.s32.totalorder %s31, 1
      %p87 = por %p85, %p86
      %p88 = scmp.ne.s32.totalorder %s77, %s78
      %p89 = scmp.eq.s32.totalorder %s31, 0
      %p90 = por %p88, %p89
      %p91 = scmp.ne.s32.totalorder %s77, %s78
      %p92 = scmp.eq.s32.totalorder %s32, 1
      %p93 = por %p91, %p92
      %p95 = scmp.ne.s32.totalorder %s78, %s94
      %p96 = scmp.eq.s32.totalorder %s32, 0
      %p97 = por %p95, %p96
      %s99 = sadd.s32 %s98, 1
      %p102 = scmp.eq.s32.totalorder %s26, 1
      %p103 = scmp.ne.s32.totalorder %s98, %s100
      %p104 = scmp.eq.s32.totalorder %s26, 0
      %p105 = por %p103, %p104
      %p106 = scmp.ne.s32.totalorder %s98, %s100
      %p107 = scmp.eq.s32.totalorder %s31, 1
      %p108 = por %p106, %p107
      %p109 = scmp.ne.s32.totalorder %s100, %s101
      %p110 = scmp.eq.s32.totalorder %s31, 0
      %p111 = por %p109, %p110
      %p112 = scmp.ne.s32.totalorder %s100, %s101
      %p113 = scmp.eq.s32.totalorder %s32, 1
      %p114 = por %p112, %p113
      %p116 = scmp.ne.s32.totalorder %s101, %s115
      %p117 = scmp.eq.s32.totalorder %s32, 0
      %p118 = por %p116, %p117
      %s120 = sadd.s32 %s119, 1
      %p123 = scmp.eq.s32.totalorder %s26, 1
      %p124 = scmp.ne.s32.totalorder %s119, %s121
      %p125 = scmp.eq.s32.totalorder %s26, 0
      %p126 = por %p124, %p125
      %p127 = scmp.ne.s32.totalorder %s119, %s121
      %p128 = scmp.eq.s32.totalorder %s31, 1
      %p129 = por %p127, %p128
      %p130 = scmp.ne.s32.totalorder %s121, %s122
      %p131 = scmp.eq.s32.totalorder %s31, 0
      %p132 = por %p130, %p131
      %p133 = scmp.ne.s32.totalorder %s121, %s122
      %p134 = scmp.eq.s32.totalorder %s32, 1
      %p135 = por %p133, %p134
      %p137 = scmp.ne.s32.totalorder %s122, %s136
      %p138 = scmp.eq.s32.totalorder %s32, 0
      %p139 = por %p137, %p138
      %s141 = sadd.s32 %s140, 1
      %p144 = scmp.eq.s32.totalorder %s26, 1
      %p145 = scmp.ne.s32.totalorder %s140, %s142
      %p146 = scmp.eq.s32.totalorder %s26, 0
      %p147 = por %p145, %p146
      %p148 = scmp.ne.s32.totalorder %s140, %s142
      %p149 = scmp.eq.s32.totalorder %s31, 1
      %p150 = por %p148, %p149
      %p151 = scmp.ne.s32.totalorder %s142, %s143
      %p152 = scmp.eq.s32.totalorder %s31, 0
      %p153 = por %p151, %p152
      %p154 = scmp.ne.s32.totalorder %s142, %s143
      %p155 = scmp.eq.s32.totalorder %s32, 1
      %p156 = por %p154, %p155
      %p158 = scmp.ne.s32.totalorder %s143, %s157
      %p159 = scmp.eq.s32.totalorder %s32, 0
      %p160 = por %p158, %p159
      %s161 = ssub.s32 %s34, %s41
      %p162 = scmp.eq.s32.totalorder %s161, 0
      %s164 = sadd.s32 %s163, 1
      %s165 = scalar_select %p162, %s163, %s164
      %p168 = pneg %p162
      %p169 = scmp.eq.s32.totalorder %s26, 1
      %p170 = por %p168, %p169
      %p171 = scmp.ne.s32.totalorder %s163, %s166
      %p172 = scmp.eq.s32.totalorder %s26, 0
      %p173 = por %p171, %p172
      %p174 = scmp.ne.s32.totalorder %s163, %s166
      %p175 = scmp.eq.s32.totalorder %s31, 1
      %p176 = por %p174, %p175
      %p177 = scmp.ne.s32.totalorder %s166, %s167
      %p178 = scmp.eq.s32.totalorder %s31, 0
      %p179 = por %p177, %p178
      %p180 = scmp.ne.s32.totalorder %s166, %s167
      %p181 = scmp.eq.s32.totalorder %s32, 1
      %p182 = por %p180, %p181
      %p184 = scmp.ne.s32.totalorder %s167, %s183
      %p185 = scmp.eq.s32.totalorder %s32, 0
      %p186 = por %p184, %p185
      %s187 = ssub.s32 %s33, %s45
      %s188 = ssub.s32 %s34, %s41
      %s189 = sor.u32 %s187, %s188
      %p190 = scmp.eq.s32.totalorder %s189, 0
      %s192 = sadd.s32 %s191, 1
      %s193 = scalar_select %p190, %s191, %s192
      %p196 = pneg %p190
      %p197 = scmp.eq.s32.totalorder %s26, 1
      %p198 = por %p196, %p197
      %p199 = scmp.ne.s32.totalorder %s191, %s194
      %p200 = scmp.eq.s32.totalorder %s26, 0
      %p201 = por %p199, %p200
      %p202 = scmp.ne.s32.totalorder %s191, %s194
      %p203 = scmp.eq.s32.totalorder %s31, 1
      %p204 = por %p202, %p203
      %p205 = scmp.ne.s32.totalorder %s194, %s195
      %p206 = scmp.eq.s32.totalorder %s31, 0
      %p207 = por %p205, %p206
      %p208 = scmp.ne.s32.totalorder %s194, %s195
      %p209 = scmp.eq.s32.totalorder %s32, 1
      %p210 = por %p208, %p209
      %p212 = scmp.ne.s32.totalorder %s195, %s211
      %p213 = scmp.eq.s32.totalorder %s32, 0
      %p214 = por %p212, %p213
      %s215 = ssub.s32 %s33, %s45
      %p216 = scmp.eq.s32.totalorder %s215, 0
      %s218 = sadd.s32 %s217, 1
      %s219 = scalar_select %p216, %s217, %s218
      %p222 = pneg %p216
      %p223 = scmp.eq.s32.totalorder %s26, 1
      %p224 = por %p222, %p223
      %p225 = scmp.ne.s32.totalorder %s217, %s220
      %p226 = scmp.eq.s32.totalorder %s26, 0
      %p227 = por %p225, %p226
      %p228 = scmp.ne.s32.totalorder %s217, %s220
      %p229 = scmp.eq.s32.totalorder %s31, 1
      %p230 = por %p228, %p229
      %p231 = scmp.ne.s32.totalorder %s220, %s221
      %p232 = scmp.eq.s32.totalorder %s31, 0
      %p233 = por %p231, %p232
      %p234 = scmp.ne.s32.totalorder %s220, %s221
      %p235 = scmp.eq.s32.totalorder %s32, 1
      %p236 = por %p234, %p235
      %p238 = scmp.ne.s32.totalorder %s221, %s237
      %p239 = scmp.eq.s32.totalorder %s32, 0
      %p240 = por %p238, %p239
      %p241 = scmp.le.s32.totalorder 1, %s26
      %p242 = scmp.lt.s32.totalorder %s26, 3
      %p243 = pnand %p241, %p242
      %p244 = pneg %p243
      // Predicated region
      $region9: #{tpu_custom_call.1} parent=5 // pred_check
        _
      $region10: #{tpu_custom_call.1} parent=5 // pred_check_branch
        %246 = sbr.rel (%p243) target = $region12
      $region11: #{tpu_custom_call.1} parent=5 // pred_region
        %s247 = ssub.s32 %s26, 1
        // Predicated region
        $region13: #{tpu_custom_call.1} parent=11 // pred_check
          %p248 = pneg %p111
        $region14: #{tpu_custom_call.1} parent=11 // pred_check_branch
          %250 = sbr.rel (%p248) target = $region16
        $region15: #{tpu_custom_call.1} parent=11 // pred_region
          _
        $region16: #{tpu_custom_call.1} parent=11 // pred_fallthru
          _
        // Predicated region
        $region17: #{tpu_custom_call.1} parent=11 // pred_check
          %p251 = pneg %p132
        $region18: #{tpu_custom_call.1} parent=11 // pred_check_branch
          %253 = sbr.rel (%p251) target = $region20
        $region19: #{tpu_custom_call.1} parent=11 // pred_region
          _
        $region20: #{tpu_custom_call.1} parent=11 // pred_fallthru
          _
        // Predicated region
        $region21: #{tpu_custom_call.1} parent=11 // pred_check
          %p254 = pneg %p153
        $region22: #{tpu_custom_call.1} parent=11 // pred_check_branch
          %256 = sbr.rel (%p254) target = $region24
        $region23: #{tpu_custom_call.1} parent=11 // pred_region
          %s258 = ssub.s32 2048, 2048
          %259 = vsyncadd [#allocation6], %s258
          %s260 = sshll.u32 [#allocation7], 4
          %s261 = int_to_ptr.vmem [resolvable:$true] %s260
          %266 = dma.hbm_to_vmem [thread:$0]  %s4, 2048, %s261, [#allocation6], 128, 128, 8
        $region24: #{tpu_custom_call.1} parent=11 // pred_fallthru
          _
        // Predicated region
        $region25: #{tpu_custom_call.1} parent=11 // pred_check
          %p267 = pneg %p179
        $region26: #{tpu_custom_call.1} parent=11 // pred_check_branch
          %269 = sbr.rel (%p267) target = $region28
        $region27: #{tpu_custom_call.1} parent=11 // pred_region
          %p270 = scmp.lt.s32.totalorder %s36, 0
          %s271 = scalar_select %p270, %s36, 0
          %s272 = scalar_lea.vmem %s5, %s271
        $region28: #{tpu_custom_call.1} parent=11 // pred_fallthru
          _
      $region12: #{tpu_custom_call.1} parent=5 // pred_fallthru
        _
      %p273 = scmp.lt.s32.totalorder %s26, 2
      // Predicated region
      $region29: #{tpu_custom_call.1} parent=5 // pred_check
        %p274 = pneg %p273
      $region30: #{tpu_custom_call.1} parent=5 // pred_check_branch
        %276 = sbr.rel (%p274) target = $region32
      $region31: #{tpu_custom_call.1} parent=5 // pred_region
        // Predicated region
        $region33: #{tpu_custom_call.1} parent=31 // pred_check
          %p277 = pneg %p58
        $region34: #{tpu_custom_call.1} parent=31 // pred_check_branch
          %279 = sbr.rel (%p277) target = $region36
        $region35: #{tpu_custom_call.1} parent=31 // pred_region
          %s280 = sand.u32 %s48, 1
          %s281 = scalar_lea.sflag [#allocation3], %s280
          %s282 = sand.u32 %s48, 1
          %s283 = smul.addr %s282, 8
          %s284 = scalar_lea.vmem [#allocation2], %s283
          %s286 = ssub.s32 128, 128
          %287 = vsyncadd %s281, %s286
          %s288 = smul.addr %s33, 128
          %s289 = scalar_lea.hbm %s0, %s288
          %s291 = sshll.u32 %s284, 4
          %s292 = int_to_ptr.vmem [resolvable:$true] %s291
          %294 = dma.hbm_to_vmem [thread:$0]  %s289, 128, %s292, %s281
        $region36: #{tpu_custom_call.1} parent=31 // pred_fallthru
          _
        // Predicated region
        $region37: #{tpu_custom_call.1} parent=31 // pred_check
          %p295 = pneg %p84
        $region38: #{tpu_custom_call.1} parent=31 // pred_check_branch
          %297 = sbr.rel (%p295) target = $region40
        $region39: #{tpu_custom_call.1} parent=31 // pred_region
          %s298 = sand.u32 %s26, 1
          %s299 = scalar_lea.sflag [#allocation6], %s298
          %s300 = sand.u32 %s74, 1
          %s301 = smul.addr %s300, 8
          %s302 = scalar_lea.vmem [#allocation5], %s301
          %s304 = ssub.s32 128, 128
          %305 = vsyncadd %s299, %s304
          %s306 = smul.addr %s33, 128
          %s307 = scalar_lea.hbm %s1, %s306
          %s309 = sshll.u32 %s302, 4
          %s310 = int_to_ptr.vmem [resolvable:$true] %s309
          %312 = dma.hbm_to_vmem [thread:$0]  %s307, 128, %s310, %s299
        $region40: #{tpu_custom_call.1} parent=31 // pred_fallthru
          _
      $region32: #{tpu_custom_call.1} parent=5 // pred_fallthru
        _
      %p313 = scmp.le.s32.totalorder 1, %s26
      %p314 = scmp.lt.s32.totalorder %s26, 3
      %p315 = pnand %p313, %p314
      %p316 = pneg %p315
      // Predicated region
      $region41: #{tpu_custom_call.1} parent=5 // pred_check
        _
      $region42: #{tpu_custom_call.1} parent=5 // pred_check_branch
        %318 = sbr.rel (%p315) target = $region44
      $region43: #{tpu_custom_call.1} parent=5 // pred_region
        %s319 = ssub.s32 %s26, 1
        %s320 = sand.u32 %s51, 1
        %s321 = scalar_lea.sflag [#allocation3], %s320
        %s322 = sand.u32 %s51, 1
        %s323 = smul.addr %s322, 8
        %s324 = scalar_lea.vmem [#allocation2], %s323
        // Predicated region
        $region45: #{tpu_custom_call.1} parent=43 // pred_check
          %p325 = pneg %p64
        $region46: #{tpu_custom_call.1} parent=43 // pred_check_branch
          %327 = sbr.rel (%p325) target = $region48
        $region47: #{tpu_custom_call.1} parent=43 // pred_region
          %328 = dma.done %s321, 128
        $region48: #{tpu_custom_call.1} parent=43 // pred_fallthru
          _
        %s329 = sand.u32 %s31, 1
        %s330 = scalar_lea.sflag [#allocation6], %s329
        %s331 = sand.u32 %s77, 1
        %s332 = smul.addr %s331, 8
        %s333 = scalar_lea.vmem [#allocation5], %s332
        // Predicated region
        $region49: #{tpu_custom_call.1} parent=43 // pred_check
          %p334 = pneg %p90
        $region50: #{tpu_custom_call.1} parent=43 // pred_check_branch
          %336 = sbr.rel (%p334) target = $region52
        $region51: #{tpu_custom_call.1} parent=43 // pred_region
          %337 = dma.done %s330, 128
        $region52: #{tpu_custom_call.1} parent=43 // pred_fallthru
          _
        // Predicated region
        $region53: #{tpu_custom_call.1} parent=43 // pred_check
          %p338 = pneg %p153
        $region54: #{tpu_custom_call.1} parent=43 // pred_check_branch
          %340 = sbr.rel (%p338) target = $region56
        $region55: #{tpu_custom_call.1} parent=43 // pred_region
          %341 = dma.done [#allocation6], 2048
        $region56: #{tpu_custom_call.1} parent=43 // pred_fallthru
          _
        %s342 = sand.u32 %s51, 1
        %s343 = scalar_lea.sflag [#allocation3], %s342
        %s344 = sand.u32 %s51, 1
        %s345 = smul.addr %s344, 8
        %s346 = scalar_lea.vmem [#allocation2], %s345
        %p347 = pneg %p64
        %p348 = pneg %p61
        %s349 = sand.u32 %s31, 1
        %s350 = scalar_lea.sflag [#allocation6], %s349
        %s351 = sand.u32 %s77, 1
        %s352 = smul.addr %s351, 8
        %s353 = scalar_lea.vmem [#allocation5], %s352
        %p354 = pneg %p90
        %p355 = pneg %p87
        %p356 = pneg %p111
        %p357 = pneg %p108
        %p358 = pneg %p132
        %p359 = pneg %p129
        %p360 = pneg %p153
        %p361 = pneg %p150
        %p362 = scmp.lt.s32.totalorder %s36, 0
        %s363 = scalar_select %p362, %s36, 0
        %s364 = scalar_lea.vmem %s5, %s363
        %p365 = pneg %p179
        %p366 = pneg %p176
        %p367 = pneg %p207
        %p368 = pneg %p204
        %s369 = sand.u32 %s194, 1
        %s370 = scalar_lea.sflag [#allocation4], %s369
        %s371 = sand.u32 %s194, 1
        %s372 = smul.addr %s371, 8
        %s373 = scalar_lea.vmem [#allocation8], %s372
        %p374 = pneg %p233
        %p375 = pneg %p230
        %s376 = sand.u32 %s220, 1
        %s377 = scalar_lea.sflag [#allocation10], %s376
        %s378 = sand.u32 %s220, 1
        %s379 = smul.addr %s378, 8
        %s380 = scalar_lea.vmem [#allocation9], %s379
        %p381 = scmp.lt.s32.totalorder %s36, 0
        %s382 = scalar_select %p381, %s36, 0
        %s383 = scalar_lea.vmem %s5, %s382
        %v384 = vld [vmem:[%s324] sm:$0xff]
        %v385 = vld [vmem:[%s333] sm:$0xff]
        %v386 = vadd.f32 %v384, %v385
        %387 = vst [vmem:[%s380] sm:$0xff] %v386
        %388 = vadd.xlane.f32.xlu0 %v386
        %v389 = vpop.xlane.xlu0 %388
        %v390 = vrcp.pop 128.0
        %v391 = vmul.f32 %v389, %v390
        %v392 = vsub.f32 %v386, %v391
        %v393 = vmul.f32 %v392, %v392
        %394 = vadd.xlane.f32.xlu0 %v393
        %v395 = vpop.xlane.xlu0 %394
        %v396 = vmul.f32 %v395, %v390
        %v397 = vadd.f32 %v396, 1e-05
        %v398 = vrsqrt.pop %v397
        %v399 = vmul.f32 %v392, %v398
        %v400 = vld [vmem:[%s2] sm:$0x1]
        %v402 = vlaneseq
        %v403 = vshrl.u32 %v402, 7
        %v404 = vsub.s32 0, %v403
        %v405 = vrot.slane %v400, %v404
        %v407 = vmul.f32 %v399, %v405
        %v408 = vld [vmem:[%s3] sm:$0x1]
        %v410 = vlaneseq
        %v411 = vshrl.u32 %v410, 7
        %v412 = vsub.s32 0, %v411
        %v413 = vrot.slane %v408, %v412
        %v415 = vadd.f32 %v407, %v413
        %v416 = vld [vmem:[#allocation7] sm:$0xff]
        %v417 = vld [vmem:[#allocation7 + $0x8] sm:$0xff]
        %v418 = vld [vmem:[#allocation7 + $0x10] sm:$0xff]
        %v419 = vld [vmem:[#allocation7 + $0x18] sm:$0xff]
        %v420 = vld [vmem:[#allocation7 + $0x20] sm:$0xff]
        %v421 = vld [vmem:[#allocation7 + $0x28] sm:$0xff]
        %v422 = vld [vmem:[#allocation7 + $0x30] sm:$0xff]
        %v423 = vld [vmem:[#allocation7 + $0x38] sm:$0xff]
        %v424 = vld [vmem:[#allocation7 + $0x40] sm:$0xff]
        %v425 = vld [vmem:[#allocation7 + $0x48] sm:$0xff]
        %v426 = vld [vmem:[#allocation7 + $0x50] sm:$0xff]
        %v427 = vld [vmem:[#allocation7 + $0x58] sm:$0xff]
        %v428 = vld [vmem:[#allocation7 + $0x60] sm:$0xff]
        %v429 = vld [vmem:[#allocation7 + $0x68] sm:$0xff]
        %v430 = vld [vmem:[#allocation7 + $0x70] sm:$0xff]
        %v431 = vld [vmem:[#allocation7 + $0x78] sm:$0xff]
        %v432 = vld [vmem:[%s383] sm:$0x1]
        %v434 = vlaneseq
        %v435 = vshrl.u32 %v434, 7
        %v436 = vsub.s32 0, %v435
        %v437 = vrot.slane %v432, %v436
        %439 = vmatprep.subr.mxu0 0.0
        %v440 = vand.u32 %v431, 4294901760
        %441 = vmatpush1.msra.mxu0 %v440
        %442 = vmatprep.subr.mxu0 0.0
        %v443 = vand.u32 %v430, 4294901760
        %444 = vmatpush1.msra.mxu0 %v443
        %445 = vmatprep.subr.mxu0 0.0
        %v446 = vand.u32 %v429, 4294901760
        %447 = vmatpush1.msra.mxu0 %v446
        %448 = vmatprep.subr.mxu0 0.0
        %v449 = vand.u32 %v428, 4294901760
        %450 = vmatpush1.msra.mxu0 %v449
        %451 = vmatprep.subr.mxu0 0.0
        %v452 = vand.u32 %v427, 4294901760
        %453 = vmatpush1.msra.mxu0 %v452
        %454 = vmatprep.subr.mxu0 0.0
        %v455 = vand.u32 %v426, 4294901760
        %456 = vmatpush1.msra.mxu0 %v455
        %457 = vmatprep.subr.mxu0 0.0
        %v458 = vand.u32 %v425, 4294901760
        %459 = vmatpush1.msra.mxu0 %v458
        %460 = vmatprep.subr.mxu0 0.0
        %v461 = vand.u32 %v424, 4294901760
        %462 = vmatpush1.msra.mxu0 %v461
        %463 = vmatprep.subr.mxu0 0.0
        %v464 = vand.u32 %v423, 4294901760
        %465 = vmatpush1.msra.mxu0 %v464
        %466 = vmatprep.subr.mxu0 0.0
        %v467 = vand.u32 %v422, 4294901760
        %468 = vmatpush1.msra.mxu0 %v467
        %469 = vmatprep.subr.mxu0 0.0
        %v470 = vand.u32 %v421, 4294901760
        %471 = vmatpush1.msra.mxu0 %v470
        %472 = vmatprep.subr.mxu0 0.0
        %v473 = vand.u32 %v420, 4294901760
        %474 = vmatpush1.msra.mxu0 %v473
        %475 = vmatprep.subr.mxu0 0.0
        %v476 = vand.u32 %v419, 4294901760
        %477 = vmatpush1.msra.mxu0 %v476
        %478 = vmatprep.subr.mxu0 0.0
        %v479 = vand.u32 %v418, 4294901760
        %480 = vmatpush1.msra.mxu0 %v479
        %481 = vmatprep.subr.mxu0 0.0
        %v482 = vand.u32 %v417, 4294901760
        %483 = vmatpush1.msra.mxu0 %v482
        %484 = vmatprep.subr.mxu0 0.0
        %v485 = vand.u32 %v416, 4294901760
        %486 = vmatpush1.msra.mxu0 %v485
        %487 = vmatprep.subr.mxu0 0.0
        %488 = vmatpush2.msra.mxu0 0.0
        %489 = vmatprep.subr.mxu0 0.0
        %490 = vmatpush2.msra.mxu0 0.0
        %491 = vmatprep.subr.mxu0 0.0
        %492 = vmatpush2.msra.mxu0 0.0
        %493 = vmatprep.subr.mxu0 0.0
        %494 = vmatpush2.msra.mxu0 0.0
        %495 = vmatprep.subr.mxu0 0.0
        %496 = vmatpush2.msra.mxu0 0.0
        %497 = vmatprep.subr.mxu0 0.0
        %498 = vmatpush2.msra.mxu0 0.0
        %499 = vmatprep.subr.mxu0 0.0
        %500 = vmatpush2.msra.mxu0 0.0
        %501 = vmatprep.subr.mxu0 0.0
        %502 = vmatpush2.msra.mxu0 0.0
        %503 = vmatprep.subr.mxu0 0.0
        %504 = vmatpush2.msra.mxu0 0.0
        %505 = vmatprep.subr.mxu0 0.0
        %506 = vmatpush2.msra.mxu0 0.0
        %507 = vmatprep.subr.mxu0 0.0
        %508 = vmatpush2.msra.mxu0 0.0
        %509 = vmatprep.subr.mxu0 0.0
        %510 = vmatpush2.msra.mxu0 0.0
        %511 = vmatprep.subr.mxu0 0.0
        %512 = vmatpush2.msra.mxu0 0.0
        %513 = vmatprep.subr.mxu0 0.0
        %514 = vmatpush2.msra.mxu0 0.0
        %515 = vmatprep.subr.mxu0 0.0
        %516 = vmatpush2.msra.mxu0 0.0
        %517 = vmatprep.subr.mxu0 0.0
        %518 = vmatpush2.msra.mxu0 0.0
        %519 = vmatprep.mubr.f32.mxu0 0.0
        %v520 = vand.u32 %v415, 4294901760
        %v521 = vsub.f32 %v415, %v520
        %v522 = vand.u32 %v521, 4294901760
        %v523 = vsub.f32 %v521, %v522
        %v524 = vand.u32 %v523, 4294901760
        %525 = vmatmul.mubr.f32.gmra.mxu0 %v524
        %v526 = vpop.f32.mrf.mxu0
        %v527 = vadd.f32 %v437, %v526
        %v528 = vpop.f32.mrf.mxu0
        %529 = vdwg.mxu0
        %530 = vmatprep.subr.mxu0 0.0
        %v531 = vand.u32 %v431, 4294901760
        %v532 = vsub.f32 %v431, %v531
        %v533 = vand.u32 %v532, 4294901760
        %v534 = vsub.f32 %v532, %v533
        %v535 = vand.u32 %v534, 4294901760
        %536 = vmatpush1.msra.mxu0 %v535
        %537 = vmatprep.subr.mxu0 0.0
        %v538 = vand.u32 %v430, 4294901760
        %v539 = vsub.f32 %v430, %v538
        %v540 = vand.u32 %v539, 4294901760
        %v541 = vsub.f32 %v539, %v540
        %v542 = vand.u32 %v541, 4294901760
        %543 = vmatpush1.msra.mxu0 %v542
        %544 = vmatprep.subr.mxu0 0.0
        %v545 = vand.u32 %v429, 4294901760
        %v546 = vsub.f32 %v429, %v545
        %v547 = vand.u32 %v546, 4294901760
        %v548 = vsub.f32 %v546, %v547
        %v549 = vand.u32 %v548, 4294901760
        %550 = vmatpush1.msra.mxu0 %v549
        %551 = vmatprep.subr.mxu0 0.0
        %v552 = vand.u32 %v428, 4294901760
        %v553 = vsub.f32 %v428, %v552
        %v554 = vand.u32 %v553, 4294901760
        %v555 = vsub.f32 %v553, %v554
        %v556 = vand.u32 %v555, 4294901760
        %557 = vmatpush1.msra.mxu0 %v556
        %558 = vmatprep.subr.mxu0 0.0
        %v559 = vand.u32 %v427, 4294901760
        %v560 = vsub.f32 %v427, %v559
        %v561 = vand.u32 %v560, 4294901760
        %v562 = vsub.f32 %v560, %v561
        %v563 = vand.u32 %v562, 4294901760
        %564 = vmatpush1.msra.mxu0 %v563
        %565 = vmatprep.subr.mxu0 0.0
        %v566 = vand.u32 %v426, 4294901760
        %v567 = vsub.f32 %v426, %v566
        %v568 = vand.u32 %v567, 4294901760
        %v569 = vsub.f32 %v567, %v568
        %v570 = vand.u32 %v569, 4294901760
        %571 = vmatpush1.msra.mxu0 %v570
        %572 = vmatprep.subr.mxu0 0.0
        %v573 = vand.u32 %v425, 4294901760
        %v574 = vsub.f32 %v425, %v573
        %v575 = vand.u32 %v574, 4294901760
        %v576 = vsub.f32 %v574, %v575
        %v577 = vand.u32 %v576, 4294901760
        %578 = vmatpush1.msra.mxu0 %v577
        %579 = vmatprep.subr.mxu0 0.0
        %v580 = vand.u32 %v424, 4294901760
        %v581 = vsub.f32 %v424, %v580
        %v582 = vand.u32 %v581, 4294901760
        %v583 = vsub.f32 %v581, %v582
        %v584 = vand.u32 %v583, 4294901760
        %585 = vmatpush1.msra.mxu0 %v584
        %586 = vmatprep.subr.mxu0 0.0
        %v587 = vand.u32 %v423, 4294901760
        %v588 = vsub.f32 %v423, %v587
        %v589 = vand.u32 %v588, 4294901760
        %v590 = vsub.f32 %v588, %v589
        %v591 = vand.u32 %v590, 4294901760
        %592 = vmatpush1.msra.mxu0 %v591
        %593 = vmatprep.subr.mxu0 0.0
        %v594 = vand.u32 %v422, 4294901760
        %v595 = vsub.f32 %v422, %v594
        %v596 = vand.u32 %v595, 4294901760
        %v597 = vsub.f32 %v595, %v596
        %v598 = vand.u32 %v597, 4294901760
        %599 = vmatpush1.msra.mxu0 %v598
        %600 = vmatprep.subr.mxu0 0.0
        %v601 = vand.u32 %v421, 4294901760
        %v602 = vsub.f32 %v421, %v601
        %v603 = vand.u32 %v602, 4294901760
        %v604 = vsub.f32 %v602, %v603
        %v605 = vand.u32 %v604, 4294901760
        %606 = vmatpush1.msra.mxu0 %v605
        %607 = vmatprep.subr.mxu0 0.0
        %v608 = vand.u32 %v420, 4294901760
        %v609 = vsub.f32 %v420, %v608
        %v610 = vand.u32 %v609, 4294901760
        %v611 = vsub.f32 %v609, %v610
        %v612 = vand.u32 %v611, 4294901760
        %613 = vmatpush1.msra.mxu0 %v612
        %614 = vmatprep.subr.mxu0 0.0
        %v615 = vand.u32 %v419, 4294901760
        %v616 = vsub.f32 %v419, %v615
        %v617 = vand.u32 %v616, 4294901760
        %v618 = vsub.f32 %v616, %v617
        %v619 = vand.u32 %v618, 4294901760
        %620 = vmatpush1.msra.mxu0 %v619
        %621 = vmatprep.subr.mxu0 0.0
        %v622 = vand.u32 %v418, 4294901760
        %v623 = vsub.f32 %v418, %v622
        %v624 = vand.u32 %v623, 4294901760
        %v625 = vsub.f32 %v623, %v624
        %v626 = vand.u32 %v625, 4294901760
        %627 = vmatpush1.msra.mxu0 %v626
        %628 = vmatprep.subr.mxu0 0.0
        %v629 = vand.u32 %v417, 4294901760
        %v630 = vsub.f32 %v417, %v629
        %v631 = vand.u32 %v630, 4294901760
        %v632 = vsub.f32 %v630, %v631
        %v633 = vand.u32 %v632, 4294901760
        %634 = vmatpush1.msra.mxu0 %v633
        %635 = vmatprep.subr.mxu0 0.0
        %v636 = vand.u32 %v416, 4294901760
        %v637 = vsub.f32 %v416, %v636
        %v638 = vand.u32 %v637, 4294901760
        %v639 = vsub.f32 %v637, %v638
        %v640 = vand.u32 %v639, 4294901760
        %641 = vmatpush1.msra.mxu0 %v640
        %642 = vmatprep.subr.mxu0 0.0
        %643 = vmatpush2.msra.mxu0 0.0
        %644 = vmatprep.subr.mxu0 0.0
        %645 = vmatpush2.msra.mxu0 0.0
        %646 = vmatprep.subr.mxu0 0.0
        %647 = vmatpush2.msra.mxu0 0.0
        %648 = vmatprep.subr.mxu0 0.0
        %649 = vmatpush2.msra.mxu0 0.0
        %650 = vmatprep.subr.mxu0 0.0
        %651 = vmatpush2.msra.mxu0 0.0
        %652 = vmatprep.subr.mxu0 0.0
        %653 = vmatpush2.msra.mxu0 0.0
        %654 = vmatprep.subr.mxu0 0.0
        %655 = vmatpush2.msra.mxu0 0.0
        %656 = vmatprep.subr.mxu0 0.0
        %657 = vmatpush2.msra.mxu0 0.0
        %658 = vmatprep.subr.mxu0 0.0
        %659 = vmatpush2.msra.mxu0 0.0
        %660 = vmatprep.subr.mxu0 0.0
        %661 = vmatpush2.msra.mxu0 0.0
        %662 = vmatprep.subr.mxu0 0.0
        %663 = vmatpush2.msra.mxu0 0.0
        %664 = vmatprep.subr.mxu0 0.0
        %665 = vmatpush2.msra.mxu0 0.0
        %666 = vmatprep.subr.mxu0 0.0
        %667 = vmatpush2.msra.mxu0 0.0
        %668 = vmatprep.subr.mxu0 0.0
        %669 = vmatpush2.msra.mxu0 0.0
        %670 = vmatprep.subr.mxu0 0.0
        %671 = vmatpush2.msra.mxu0 0.0
        %672 = vmatprep.subr.mxu0 0.0
        %673 = vmatpush2.msra.mxu0 0.0
        %674 = vmatprep.mubr.f32.mxu0 0.0
        %v675 = vand.u32 %v415, 4294901760
        %676 = vmatmul.mubr.f32.gmra.mxu0 %v675
        %v677 = vpop.f32.mrf.mxu0
        %v678 = vadd.f32 %v527, %v677
        %v679 = vpop.f32.mrf.mxu0
        %680 = vdwg.mxu0
        %681 = vmatprep.subr.mxu0 0.0
        %v682 = vand.u32 %v431, 4294901760
        %v683 = vsub.f32 %v431, %v682
        %684 = vmatpush1.msra.mxu0 %v683
        %685 = vmatprep.subr.mxu0 0.0
        %v686 = vand.u32 %v430, 4294901760
        %v687 = vsub.f32 %v430, %v686
        %688 = vmatpush1.msra.mxu0 %v687
        %689 = vmatprep.subr.mxu0 0.0
        %v690 = vand.u32 %v429, 4294901760
        %v691 = vsub.f32 %v429, %v690
        %692 = vmatpush1.msra.mxu0 %v691
        %693 = vmatprep.subr.mxu0 0.0
        %v694 = vand.u32 %v428, 4294901760
        %v695 = vsub.f32 %v428, %v694
        %696 = vmatpush1.msra.mxu0 %v695
        %697 = vmatprep.subr.mxu0 0.0
        %v698 = vand.u32 %v427, 4294901760
        %v699 = vsub.f32 %v427, %v698
        %700 = vmatpush1.msra.mxu0 %v699
        %701 = vmatprep.subr.mxu0 0.0
        %v702 = vand.u32 %v426, 4294901760
        %v703 = vsub.f32 %v426, %v702
        %704 = vmatpush1.msra.mxu0 %v703
        %705 = vmatprep.subr.mxu0 0.0
        %v706 = vand.u32 %v425, 4294901760
        %v707 = vsub.f32 %v425, %v706
        %708 = vmatpush1.msra.mxu0 %v707
        %709 = vmatprep.subr.mxu0 0.0
        %v710 = vand.u32 %v424, 4294901760
        %v711 = vsub.f32 %v424, %v710
        %712 = vmatpush1.msra.mxu0 %v711
        %713 = vmatprep.subr.mxu0 0.0
        %v714 = vand.u32 %v423, 4294901760
        %v715 = vsub.f32 %v423, %v714
        %716 = vmatpush1.msra.mxu0 %v715
        %717 = vmatprep.subr.mxu0 0.0
        %v718 = vand.u32 %v422, 4294901760
        %v719 = vsub.f32 %v422, %v718
        %720 = vmatpush1.msra.mxu0 %v719
        %721 = vmatprep.subr.mxu0 0.0
        %v722 = vand.u32 %v421, 4294901760
        %v723 = vsub.f32 %v421, %v722
        %724 = vmatpush1.msra.mxu0 %v723
        %725 = vmatprep.subr.mxu0 0.0
        %v726 = vand.u32 %v420, 4294901760
        %v727 = vsub.f32 %v420, %v726
        %728 = vmatpush1.msra.mxu0 %v727
        %729 = vmatprep.subr.mxu0 0.0
        %v730 = vand.u32 %v419, 4294901760
        %v731 = vsub.f32 %v419, %v730
        %732 = vmatpush1.msra.mxu0 %v731
        %733 = vmatprep.subr.mxu0 0.0
        %v734 = vand.u32 %v418, 4294901760
        %v735 = vsub.f32 %v418, %v734
        %736 = vmatpush1.msra.mxu0 %v735
        %737 = vmatprep.subr.mxu0 0.0
        %v738 = vand.u32 %v417, 4294901760
        %v739 = vsub.f32 %v417, %v738
        %740 = vmatpush1.msra.mxu0 %v739
        %741 = vmatprep.subr.mxu0 0.0
        %v742 = vand.u32 %v416, 4294901760
        %v743 = vsub.f32 %v416, %v742
        %744 = vmatpush1.msra.mxu0 %v743
        %745 = vmatprep.subr.mxu0 0.0
        %746 = vmatpush2.msra.mxu0 0.0
        %747 = vmatprep.subr.mxu0 0.0
        %748 = vmatpush2.msra.mxu0 0.0
        %749 = vmatprep.subr.mxu0 0.0
        %750 = vmatpush2.msra.mxu0 0.0
        %751 = vmatprep.subr.mxu0 0.0
        %752 = vmatpush2.msra.mxu0 0.0
        %753 = vmatprep.subr.mxu0 0.0
        %754 = vmatpush2.msra.mxu0 0.0
        %755 = vmatprep.subr.mxu0 0.0
        %756 = vmatpush2.msra.mxu0 0.0
        %757 = vmatprep.subr.mxu0 0.0
        %758 = vmatpush2.msra.mxu0 0.0
        %759 = vmatprep.subr.mxu0 0.0
        %760 = vmatpush2.msra.mxu0 0.0
        %761 = vmatprep.subr.mxu0 0.0
        %762 = vmatpush2.msra.mxu0 0.0
        %763 = vmatprep.subr.mxu0 0.0
        %764 = vmatpush2.msra.mxu0 0.0
        %765 = vmatprep.subr.mxu0 0.0
        %766 = vmatpush2.msra.mxu0 0.0
        %767 = vmatprep.subr.mxu0 0.0
        %768 = vmatpush2.msra.mxu0 0.0
        %769 = vmatprep.subr.mxu0 0.0
        %770 = vmatpush2.msra.mxu0 0.0
        %771 = vmatprep.subr.mxu0 0.0
        %772 = vmatpush2.msra.mxu0 0.0
        %773 = vmatprep.subr.mxu0 0.0
        %774 = vmatpush2.msra.mxu0 0.0
        %775 = vmatprep.subr.mxu0 0.0
        %776 = vmatpush2.msra.mxu0 0.0
        %777 = vmatprep.mubr.f32.mxu0 0.0
        %v778 = vand.u32 %v415, 4294901760
        %v779 = vsub.f32 %v415, %v778
        %780 = vmatmul.mubr.f32.gmra.mxu0 %v779
        %v781 = vpop.f32.mrf.mxu0
        %v782 = vadd.f32 %v678, %v781
        %v783 = vpop.f32.mrf.mxu0
        %784 = vdwg.mxu0
        %785 = vmatprep.subr.mxu0 0.0
        %v786 = vand.u32 %v431, 4294901760
        %787 = vmatpush1.msra.mxu0 %v786
        %788 = vmatprep.subr.mxu0 0.0
        %v789 = vand.u32 %v430, 4294901760
        %790 = vmatpush1.msra.mxu0 %v789
        %791 = vmatprep.subr.mxu0 0.0
        %v792 = vand.u32 %v429, 4294901760
        %793 = vmatpush1.msra.mxu0 %v792
        %794 = vmatprep.subr.mxu0 0.0
        %v795 = vand.u32 %v428, 4294901760
        %796 = vmatpush1.msra.mxu0 %v795
        %797 = vmatprep.subr.mxu0 0.0
        %v798 = vand.u32 %v427, 4294901760
        %799 = vmatpush1.msra.mxu0 %v798
        %800 = vmatprep.subr.mxu0 0.0
        %v801 = vand.u32 %v426, 4294901760
        %802 = vmatpush1.msra.mxu0 %v801
        %803 = vmatprep.subr.mxu0 0.0
        %v804 = vand.u32 %v425, 4294901760
        %805 = vmatpush1.msra.mxu0 %v804
        %806 = vmatprep.subr.mxu0 0.0
        %v807 = vand.u32 %v424, 4294901760
        %808 = vmatpush1.msra.mxu0 %v807
        %809 = vmatprep.subr.mxu0 0.0
        %v810 = vand.u32 %v423, 4294901760
        %811 = vmatpush1.msra.mxu0 %v810
        %812 = vmatprep.subr.mxu0 0.0
        %v813 = vand.u32 %v422, 4294901760
        %814 = vmatpush1.msra.mxu0 %v813
        %815 = vmatprep.subr.mxu0 0.0
        %v816 = vand.u32 %v421, 4294901760
        %817 = vmatpush1.msra.mxu0 %v816
        %818 = vmatprep.subr.mxu0 0.0
        %v819 = vand.u32 %v420, 4294901760
        %820 = vmatpush1.msra.mxu0 %v819
        %821 = vmatprep.subr.mxu0 0.0
        %v822 = vand.u32 %v419, 4294901760
        %823 = vmatpush1.msra.mxu0 %v822
        %824 = vmatprep.subr.mxu0 0.0
        %v825 = vand.u32 %v418, 4294901760
        %826 = vmatpush1.msra.mxu0 %v825
        %827 = vmatprep.subr.mxu0 0.0
        %v828 = vand.u32 %v417, 4294901760
        %829 = vmatpush1.msra.mxu0 %v828
        %830 = vmatprep.subr.mxu0 0.0
        %v831 = vand.u32 %v416, 4294901760
        %832 = vmatpush1.msra.mxu0 %v831
        %833 = vmatprep.subr.mxu0 0.0
        %834 = vmatpush2.msra.mxu0 0.0
        %835 = vmatprep.subr.mxu0 0.0
        %836 = vmatpush2.msra.mxu0 0.0
        %837 = vmatprep.subr.mxu0 0.0
        %838 = vmatpush2.msra.mxu0 0.0
        %839 = vmatprep.subr.mxu0 0.0
        %840 = vmatpush2.msra.mxu0 0.0
        %841 = vmatprep.subr.mxu0 0.0
        %842 = vmatpush2.msra.mxu0 0.0
        %843 = vmatprep.subr.mxu0 0.0
        %844 = vmatpush2.msra.mxu0 0.0
        %845 = vmatprep.subr.mxu0 0.0
        %846 = vmatpush2.msra.mxu0 0.0
        %847 = vmatprep.subr.mxu0 0.0
        %848 = vmatpush2.msra.mxu0 0.0
        %849 = vmatprep.subr.mxu0 0.0
        %850 = vmatpush2.msra.mxu0 0.0
        %851 = vmatprep.subr.mxu0 0.0
        %852 = vmatpush2.msra.mxu0 0.0
        %853 = vmatprep.subr.mxu0 0.0
        %854 = vmatpush2.msra.mxu0 0.0
        %855 = vmatprep.subr.mxu0 0.0
        %856 = vmatpush2.msra.mxu0 0.0
        %857 = vmatprep.subr.mxu0 0.0
        %858 = vmatpush2.msra.mxu0 0.0
        %859 = vmatprep.subr.mxu0 0.0
        %860 = vmatpush2.msra.mxu0 0.0
        %861 = vmatprep.subr.mxu0 0.0
        %862 = vmatpush2.msra.mxu0 0.0
        %863 = vmatprep.subr.mxu0 0.0
        %864 = vmatpush2.msra.mxu0 0.0
        %865 = vmatprep.mubr.f32.mxu0 0.0
        %v866 = vand.u32 %v415, 4294901760
        %v867 = vsub.f32 %v415, %v866
        %v868 = vand.u32 %v867, 4294901760
        %869 = vmatmul.mubr.f32.gmra.mxu0 %v868
        %v870 = vpop.f32.mrf.mxu0
        %v871 = vadd.f32 %v782, %v870
        %v872 = vpop.f32.mrf.mxu0
        %873 = vdwg.mxu0
        %874 = vmatprep.subr.mxu0 0.0
        %v875 = vand.u32 %v431, 4294901760
        %v876 = vsub.f32 %v431, %v875
        %v877 = vand.u32 %v876, 4294901760
        %878 = vmatpush1.msra.mxu0 %v877
        %879 = vmatprep.subr.mxu0 0.0
        %v880 = vand.u32 %v430, 4294901760
        %v881 = vsub.f32 %v430, %v880
        %v882 = vand.u32 %v881, 4294901760
        %883 = vmatpush1.msra.mxu0 %v882
        %884 = vmatprep.subr.mxu0 0.0
        %v885 = vand.u32 %v429, 4294901760
        %v886 = vsub.f32 %v429, %v885
        %v887 = vand.u32 %v886, 4294901760
        %888 = vmatpush1.msra.mxu0 %v887
        %889 = vmatprep.subr.mxu0 0.0
        %v890 = vand.u32 %v428, 4294901760
        %v891 = vsub.f32 %v428, %v890
        %v892 = vand.u32 %v891, 4294901760
        %893 = vmatpush1.msra.mxu0 %v892
        %894 = vmatprep.subr.mxu0 0.0
        %v895 = vand.u32 %v427, 4294901760
        %v896 = vsub.f32 %v427, %v895
        %v897 = vand.u32 %v896, 4294901760
        %898 = vmatpush1.msra.mxu0 %v897
        %899 = vmatprep.subr.mxu0 0.0
        %v900 = vand.u32 %v426, 4294901760
        %v901 = vsub.f32 %v426, %v900
        %v902 = vand.u32 %v901, 4294901760
        %903 = vmatpush1.msra.mxu0 %v902
        %904 = vmatprep.subr.mxu0 0.0
        %v905 = vand.u32 %v425, 4294901760
        %v906 = vsub.f32 %v425, %v905
        %v907 = vand.u32 %v906, 4294901760
        %908 = vmatpush1.msra.mxu0 %v907
        %909 = vmatprep.subr.mxu0 0.0
        %v910 = vand.u32 %v424, 4294901760
        %v911 = vsub.f32 %v424, %v910
        %v912 = vand.u32 %v911, 4294901760
        %913 = vmatpush1.msra.mxu0 %v912
        %914 = vmatprep.subr.mxu0 0.0
        %v915 = vand.u32 %v423, 4294901760
        %v916 = vsub.f32 %v423, %v915
        %v917 = vand.u32 %v916, 4294901760
        %918 = vmatpush1.msra.mxu0 %v917
        %919 = vmatprep.subr.mxu0 0.0
        %v920 = vand.u32 %v422, 4294901760
        %v921 = vsub.f32 %v422, %v920
        %v922 = vand.u32 %v921, 4294901760
        %923 = vmatpush1.msra.mxu0 %v922
        %924 = vmatprep.subr.mxu0 0.0
        %v925 = vand.u32 %v421, 4294901760
        %v926 = vsub.f32 %v421, %v925
        %v927 = vand.u32 %v926, 4294901760
        %928 = vmatpush1.msra.mxu0 %v927
        %929 = vmatprep.subr.mxu0 0.0
        %v930 = vand.u32 %v420, 4294901760
        %v931 = vsub.f32 %v420, %v930
        %v932 = vand.u32 %v931, 4294901760
        %933 = vmatpush1.msra.mxu0 %v932
        %934 = vmatprep.subr.mxu0 0.0
        %v935 = vand.u32 %v419, 4294901760
        %v936 = vsub.f32 %v419, %v935
        %v937 = vand.u32 %v936, 4294901760
        %938 = vmatpush1.msra.mxu0 %v937
        %939 = vmatprep.subr.mxu0 0.0
        %v940 = vand.u32 %v418, 4294901760
        %v941 = vsub.f32 %v418, %v940
        %v942 = vand.u32 %v941, 4294901760
        %943 = vmatpush1.msra.mxu0 %v942
        %944 = vmatprep.subr.mxu0 0.0
        %v945 = vand.u32 %v417, 4294901760
        %v946 = vsub.f32 %v417, %v945
        %v947 = vand.u32 %v946, 4294901760
        %948 = vmatpush1.msra.mxu0 %v947
        %949 = vmatprep.subr.mxu0 0.0
        %v950 = vand.u32 %v416, 4294901760
        %v951 = vsub.f32 %v416, %v950
        %v952 = vand.u32 %v951, 4294901760
        %953 = vmatpush1.msra.mxu0 %v952
        %954 = vmatprep.subr.mxu0 0.0
        %955 = vmatpush2.msra.mxu0 0.0
        %956 = vmatprep.subr.mxu0 0.0
        %957 = vmatpush2.msra.mxu0 0.0
        %958 = vmatprep.subr.mxu0 0.0
        %959 = vmatpush2.msra.mxu0 0.0
        %960 = vmatprep.subr.mxu0 0.0
        %961 = vmatpush2.msra.mxu0 0.0
        %962 = vmatprep.subr.mxu0 0.0
        %963 = vmatpush2.msra.mxu0 0.0
        %964 = vmatprep.subr.mxu0 0.0
        %965 = vmatpush2.msra.mxu0 0.0
        %966 = vmatprep.subr.mxu0 0.0
        %967 = vmatpush2.msra.mxu0 0.0
        %968 = vmatprep.subr.mxu0 0.0
        %969 = vmatpush2.msra.mxu0 0.0
        %970 = vmatprep.subr.mxu0 0.0
        %971 = vmatpush2.msra.mxu0 0.0
        %972 = vmatprep.subr.mxu0 0.0
        %973 = vmatpush2.msra.mxu0 0.0
        %974 = vmatprep.subr.mxu0 0.0
        %975 = vmatpush2.msra.mxu0 0.0
        %976 = vmatprep.subr.mxu0 0.0
        %977 = vmatpush2.msra.mxu0 0.0
        %978 = vmatprep.subr.mxu0 0.0
        %979 = vmatpush2.msra.mxu0 0.0
        %980 = vmatprep.subr.mxu0 0.0
        %981 = vmatpush2.msra.mxu0 0.0
        %982 = vmatprep.subr.mxu0 0.0
        %983 = vmatpush2.msra.mxu0 0.0
        %984 = vmatprep.subr.mxu0 0.0
        %985 = vmatpush2.msra.mxu0 0.0
        %986 = vmatprep.mubr.f32.mxu0 0.0
        %v987 = vand.u32 %v415, 4294901760
        %988 = vmatmul.mubr.f32.gmra.mxu0 %v987
        %v989 = vpop.f32.mrf.mxu0
        %v990 = vadd.f32 %v871, %v989
        %v991 = vpop.f32.mrf.mxu0
        %992 = vdwg.mxu0
        %993 = vmatprep.subr.mxu0 0.0
        %v994 = vand.u32 %v431, 4294901760
        %995 = vmatpush1.msra.mxu0 %v994
        %996 = vmatprep.subr.mxu0 0.0
        %v997 = vand.u32 %v430, 4294901760
        %998 = vmatpush1.msra.mxu0 %v997
        %999 = vmatprep.subr.mxu0 0.0
        %v1000 = vand.u32 %v429, 4294901760
        %1001 = vmatpush1.msra.mxu0 %v1000
        %1002 = vmatprep.subr.mxu0 0.0
        %v1003 = vand.u32 %v428, 4294901760
        %1004 = vmatpush1.msra.mxu0 %v1003
        %1005 = vmatprep.subr.mxu0 0.0
        %v1006 = vand.u32 %v427, 4294901760
        %1007 = vmatpush1.msra.mxu0 %v1006
        %1008 = vmatprep.subr.mxu0 0.0
        %v1009 = vand.u32 %v426, 4294901760
        %1010 = vmatpush1.msra.mxu0 %v1009
        %1011 = vmatprep.subr.mxu0 0.0
        %v1012 = vand.u32 %v425, 4294901760
        %1013 = vmatpush1.msra.mxu0 %v1012
        %1014 = vmatprep.subr.mxu0 0.0
        %v1015 = vand.u32 %v424, 4294901760
        %1016 = vmatpush1.msra.mxu0 %v1015
        %1017 = vmatprep.subr.mxu0 0.0
        %v1018 = vand.u32 %v423, 4294901760
        %1019 = vmatpush1.msra.mxu0 %v1018
        %1020 = vmatprep.subr.mxu0 0.0
        %v1021 = vand.u32 %v422, 4294901760
        %1022 = vmatpush1.msra.mxu0 %v1021
        %1023 = vmatprep.subr.mxu0 0.0
        %v1024 = vand.u32 %v421, 4294901760
        %1025 = vmatpush1.msra.mxu0 %v1024
        %1026 = vmatprep.subr.mxu0 0.0
        %v1027 = vand.u32 %v420, 4294901760
        %1028 = vmatpush1.msra.mxu0 %v1027
        %1029 = vmatprep.subr.mxu0 0.0
        %v1030 = vand.u32 %v419, 4294901760
        %1031 = vmatpush1.msra.mxu0 %v1030
        %1032 = vmatprep.subr.mxu0 0.0
        %v1033 = vand.u32 %v418, 4294901760
        %1034 = vmatpush1.msra.mxu0 %v1033
        %1035 = vmatprep.subr.mxu0 0.0
        %v1036 = vand.u32 %v417, 4294901760
        %1037 = vmatpush1.msra.mxu0 %v1036
        %1038 = vmatprep.subr.mxu0 0.0
        %v1039 = vand.u32 %v416, 4294901760
        %1040 = vmatpush1.msra.mxu0 %v1039
        %1041 = vmatprep.subr.mxu0 0.0
        %1042 = vmatpush2.msra.mxu0 0.0
        %1043 = vmatprep.subr.mxu0 0.0
        %1044 = vmatpush2.msra.mxu0 0.0
        %1045 = vmatprep.subr.mxu0 0.0
        %1046 = vmatpush2.msra.mxu0 0.0
        %1047 = vmatprep.subr.mxu0 0.0
        %1048 = vmatpush2.msra.mxu0 0.0
        %1049 = vmatprep.subr.mxu0 0.0
        %1050 = vmatpush2.msra.mxu0 0.0
        %1051 = vmatprep.subr.mxu0 0.0
        %1052 = vmatpush2.msra.mxu0 0.0
        %1053 = vmatprep.subr.mxu0 0.0
        %1054 = vmatpush2.msra.mxu0 0.0
        %1055 = vmatprep.subr.mxu0 0.0
        %1056 = vmatpush2.msra.mxu0 0.0
        %1057 = vmatprep.subr.mxu0 0.0
        %1058 = vmatpush2.msra.mxu0 0.0
        %1059 = vmatprep.subr.mxu0 0.0
        %1060 = vmatpush2.msra.mxu0 0.0
        %1061 = vmatprep.subr.mxu0 0.0
        %1062 = vmatpush2.msra.mxu0 0.0
        %1063 = vmatprep.subr.mxu0 0.0
        %1064 = vmatpush2.msra.mxu0 0.0
        %1065 = vmatprep.subr.mxu0 0.0
        %1066 = vmatpush2.msra.mxu0 0.0
        %1067 = vmatprep.subr.mxu0 0.0
        %1068 = vmatpush2.msra.mxu0 0.0
        %1069 = vmatprep.subr.mxu0 0.0
        %1070 = vmatpush2.msra.mxu0 0.0
        %1071 = vmatprep.subr.mxu0 0.0
        %1072 = vmatpush2.msra.mxu0 0.0
        %1073 = vmatprep.mubr.f32.mxu0 0.0
        %v1074 = vand.u32 %v415, 4294901760
        %1075 = vmatmul.mubr.f32.gmra.mxu0 %v1074
        %v1076 = vpop.f32.mrf.mxu0
        %v1077 = vadd.f32 %v990, %v1076
        %v1078 = vpop.f32.mrf.mxu0
        %1079 = vdwg.mxu0
        %1080 = vst [vmem:[%s373] sm:$0xff] %v1077
        %s1081 = sand.u32 %s194, 1
        %s1082 = scalar_lea.sflag [#allocation4], %s1081
        %s1083 = sand.u32 %s194, 1
        %s1084 = smul.addr %s1083, 8
        %s1085 = scalar_lea.vmem [#allocation8], %s1084
        %s1086 = sand.u32 %s220, 1
        %s1087 = scalar_lea.sflag [#allocation10], %s1086
        %s1088 = sand.u32 %s220, 1
        %s1089 = smul.addr %s1088, 8
        %s1090 = scalar_lea.vmem [#allocation9], %s1089
        // Predicated region
        $region57: #{tpu_custom_call.1} parent=43 // pred_check
          %p1091 = pneg %p204
        $region58: #{tpu_custom_call.1} parent=43 // pred_check_branch
          %1093 = sbr.rel (%p1091) target = $region60
        $region59: #{tpu_custom_call.1} parent=43 // pred_region
          %s1095 = ssub.s32 128, 128
          %1096 = vsyncadd %s1082, %s1095
          %s1097 = sadd.s32 %s36, %s35
          %s1098 = smul.addr %s1097, 128
          %s1099 = scalar_lea.hbm %s6, %s1098
          %s1101 = sshll.u32 %s1085, 4
          %s1102 = int_to_ptr.vmem [resolvable:$true] %s1101
          %1104 = dma.vmem_to_hbm [thread:$0]  %s1102, 128, %s1099, %s1082
        $region60: #{tpu_custom_call.1} parent=43 // pred_fallthru
          _
        // Predicated region
        $region61: #{tpu_custom_call.1} parent=43 // pred_check
          %p1105 = pneg %p230
        $region62: #{tpu_custom_call.1} parent=43 // pred_check_branch
          %1107 = sbr.rel (%p1105) target = $region64
        $region63: #{tpu_custom_call.1} parent=43 // pred_region
          %s1109 = ssub.s32 128, 128
          %1110 = vsyncadd %s1087, %s1109
          %s1111 = smul.addr %s35, 128
          %s1112 = scalar_lea.hbm %s7, %s1111
          %s1114 = sshll.u32 %s1090, 4
          %s1115 = int_to_ptr.vmem [resolvable:$true] %s1114
          %1117 = dma.vmem_to_hbm [thread:$0]  %s1115, 128, %s1112, %s1087
        $region64: #{tpu_custom_call.1} parent=43 // pred_fallthru
          _
      $region44: #{tpu_custom_call.1} parent=5 // pred_fallthru
        _
      %p1118 = scmp.le.s32.totalorder 2, %s26
      // Predicated region
      $region65: #{tpu_custom_call.1} parent=5 // pred_check
        %p1119 = pneg %p1118
      $region66: #{tpu_custom_call.1} parent=5 // pred_check_branch
        %1121 = sbr.rel (%p1119) target = $region68
      $region67: #{tpu_custom_call.1} parent=5 // pred_region
        %s1122 = ssub.s32 %s26, 2
        // Predicated region
        $region69: #{tpu_custom_call.1} parent=67 // pred_check
          %p1123 = pneg %p210
        $region70: #{tpu_custom_call.1} parent=67 // pred_check_branch
          %1125 = sbr.rel (%p1123) target = $region72
        $region71: #{tpu_custom_call.1} parent=67 // pred_region
          %s1126 = sand.u32 %s195, 1
          %s1127 = scalar_lea.sflag [#allocation4], %s1126
          %s1128 = sand.u32 %s195, 1
          %s1129 = smul.addr %s1128, 8
          %s1130 = scalar_lea.vmem [#allocation8], %s1129
          %1131 = dma.done %s1127, 128
        $region72: #{tpu_custom_call.1} parent=67 // pred_fallthru
          _
        // Predicated region
        $region73: #{tpu_custom_call.1} parent=67 // pred_check
          %p1132 = pneg %p236
        $region74: #{tpu_custom_call.1} parent=67 // pred_check_branch
          %1134 = sbr.rel (%p1132) target = $region76
        $region75: #{tpu_custom_call.1} parent=67 // pred_region
          %s1135 = sand.u32 %s221, 1
          %s1136 = scalar_lea.sflag [#allocation10], %s1135
          %s1137 = sand.u32 %s221, 1
          %s1138 = smul.addr %s1137, 8
          %s1139 = scalar_lea.vmem [#allocation9], %s1138
          %1140 = dma.done %s1136, 128
        $region76: #{tpu_custom_call.1} parent=67 // pred_fallthru
          _
      $region68: #{tpu_custom_call.1} parent=5 // pred_fallthru
        _
    $region6: #{tpu_custom_call.1} parent=1 // loop_footer
      %s30 = sadd.s32 1, %s26
    $region7: #{tpu_custom_call.1} parent=1 // loop_footer_branch
      %25 = sbr.rel target = $region3
    $region8: #{tpu_custom_call.1} parent=1 // loop_exit
      _
    %1141 = vsyncpa [#allocation3], 1
    %s1142 = scalar_lea.sflag [#allocation3], 1
    %1143 = vsyncpa %s1142, 1
    %1144 = vsyncpa [#allocation6], 1
    %s1145 = scalar_lea.sflag [#allocation6], 1
    %1146 = vsyncpa %s1145, 1
    %1147 = vsyncpa [#allocation4], 1
    %s1148 = scalar_lea.sflag [#allocation4], 1
    %1149 = vsyncpa %s1148, 1
    %1150 = vsyncpa [#allocation10], 1
    %s1151 = scalar_lea.sflag [#allocation10], 1
    %1152 = vsyncpa %s1151, 1

</llo_original>
